<compile_context>
chip_gen: v5e
topology: v5e:2x2
jax: 0.10.0
libtpu: 0.0.40
codegen_flags: <defaults>
</compile_context>

<pallas_src>
import math

import jax
import jax.numpy as jnp
from jax.experimental import pallas as pl
from jax.experimental.pallas import tpu as pltpu


def _add_pos_kernel(x_ref, pos_ref, o_ref):
    # x_ref / o_ref: (TS, B*E) lane-dense tiles in the input dtype.
    # pos_ref:       (TS, E) f32 rows; replicate over the batch along lanes.
    b = x_ref.shape[1] // pos_ref.shape[1]
    pos = jnp.tile(pos_ref[...], (1, b))                      # (TS, B*E) f32
    o_ref[...] = (x_ref[...].astype(jnp.float32) + pos).astype(o_ref.dtype)


def make_pos_embedding(emb_size: int, maxlen: int = 750) -> jnp.ndarray:
    """Deterministic buffer identical to the PyTorch __init__ computation."""
    assert emb_size % 2 == 0, "emb_size must be even (same as the torch module)"
    den = jnp.exp(-jnp.arange(0, emb_size, 2, dtype=jnp.float32)
                  * math.log(10000.0) / emb_size)                    # (E/2,)
    pos = jnp.arange(0, maxlen, dtype=jnp.float32).reshape(maxlen, 1)  # (L,1)
    pe = jnp.zeros((maxlen, emb_size), dtype=jnp.float32)
    pe = pe.at[:, 0::2].set(jnp.sin(pos * den))
    pe = pe.at[:, 1::2].set(jnp.cos(pos * den))
    return pe[:, None, :]                                             # (L,1,E)


def positional_encoding(token_embedding: jnp.ndarray,
                        pos_embedding: jnp.ndarray,
                        *,
                        min_pallas_bytes: int = 64 * 1024) -> jnp.ndarray:
    """token_embedding: (S, B, E); pos_embedding: (maxlen, 1, E) f32.

    min_pallas_bytes: problems smaller than this (total x bytes) are routed to
    a plain XLA add, where kernel-launch overhead would dominate.
    """
    S, B, E = token_embedding.shape
    assert pos_embedding.shape[0] >= S and pos_embedding.shape[-1] == E
    dtype = token_embedding.dtype
    itemsize = jnp.dtype(dtype).itemsize

    # Raw (S, E) f32 pos rows (no pre-broadcast over batch, no pre-cast).
    pos = pos_embedding[:S, 0, :].astype(jnp.float32)                 # (S, E)

    row_x = B * E * itemsize          # one x / out row in bytes
    row_pos = E * 4                   # one pos row in bytes (f32)
    sub = max(8, 32 // max(itemsize, 1))   # sublane packing: 8 f32 / 16 bf16 / 32 i8

    # Largest sequence tile whose double-buffered streams (x in, out, pos in)
    # fit under a ~12 MiB VMEM budget (safe under the default scoped VMEM on
    # every generation; v6e/v7x could go bigger with vmem_limit_bytes).
    budget = 12 * 1024 * 1024
    ts = (budget // (2 * (2 * row_x + row_pos)) // sub) * sub

    total_bytes = S * row_x
    use_pallas = (
        total_bytes >= min_pallas_bytes    # tiny: launch overhead dominates
        and ts >= sub                      # rows fit the VMEM budget
        and E % 128 == 0                   # lane-aligned in-kernel broadcast
    )
    if not use_pallas:
        # TODO(synk): lane-dim (2-D grid) tiling for extremely wide B*E rows;
        # for now fall back to a plain XLA add (also the right call for tiny
        # shapes, where kernel-launch overhead dwarfs the data movement).
        return (token_embedding.astype(jnp.float32)
                + pos[:, None, :]).astype(dtype)

    TS = min(ts, sub * pl.cdiv(S, sub))
    # v7x has 2 TensorCores per chip: for non-trivial sizes keep >= 2 parallel
    # grid steps so the work shards across both cores (harmless on v5e/v6e).
    if TS >= S and total_bytes > (1 << 20) and S >= 2 * sub:
        TS = sub * pl.cdiv(pl.cdiv(S, 2), sub)

    grid = (pl.cdiv(S, TS),)

    cost = pl.CostEstimate(
        flops=S * B * E,
        transcendentals=0,
        bytes_accessed=2 * S * row_x + S * row_pos)

    x2d = token_embedding.reshape(S, B * E)        # free, contiguous flatten

    out2d = pl.pallas_call(
        _add_pos_kernel,
        out_shape=jax.ShapeDtypeStruct((S, B * E), dtype),
        grid=grid,
        in_specs=[
            pl.BlockSpec((TS, B * E), lambda i: (i, 0)),   # x tile
            pl.BlockSpec((TS, E), lambda i: (i, 0)),       # pos rows (no batch bcast)
        ],
        out_specs=pl.BlockSpec((TS, B * E), lambda i: (i, 0)),
        compiler_params=pltpu.CompilerParams(
            dimension_semantics=("parallel",)),
        cost_estimate=cost,
    )(x2d, pos)

    return out2d.reshape(S, B, E)


if __name__ == "__main__":
    emb_size = 128      # E
    seq_len = 8         # S
    batch = 4           # B
    maxlen = 750

    key = jax.random.PRNGKey(0)
    token_embedding = jax.random.normal(
        key, (seq_len, batch, emb_size), dtype=jnp.float32)

    pos_embedding = make_pos_embedding(emb_size, maxlen)

    # Force the Pallas path (the default heuristic would route this tiny
    # 16 KiB demo problem to the fused-XLA-add fast path).
    out = positional_encoding(token_embedding, pos_embedding, min_pallas_bytes=0)
    out = jax.block_until_ready(out)

    # Reference check (pure JAX; eval-mode dropout == identity).
    ref = token_embedding + pos_embedding[:seq_len, :]
    assert out.shape == (seq_len, batch, emb_size)
    assert jnp.allclose(out, ref, atol=1e-6, rtol=1e-6)

    print("KERNEL_OK")
</pallas_src>

<mosaic_0001>
module attributes {stable_mosaic.version = 11 : i64} {
  func.func @_add_pos_kernel(%arg0: i32, %arg1: memref<8x512xf32, #tpu.memory_space<vmem>>, %arg2: memref<8x128xf32, #tpu.memory_space<vmem>>, %arg3: memref<8x512xf32, #tpu.memory_space<vmem>>) attributes {dimension_semantics = [#tpu.dimension_semantics<parallel>], iteration_bounds = array<i64: 1>, scalar_prefetch = 0 : i64, scratch_operands = 0 : i64, tpu.core_type = #tpu.core_type<tc>, window_params = [{transform_indices = @transform_0, window_bounds = array<i64: 8, 512>}, {transform_indices = @transform_1, window_bounds = array<i64: 8, 128>}, {transform_indices = @transform_2, window_bounds = array<i64: 8, 512>}]} {
    %c0 = arith.constant 0 : index
    %c0_0 = arith.constant 0 : index
    %0 = vector.load %arg2[%c0, %c0_0] : memref<8x128xf32, #tpu.memory_space<vmem>>, vector<8x128xf32>
    %1 = tpu.concatenate %0, %0, %0, %0 in 1 : vector<8x128xf32>, vector<8x128xf32>, vector<8x128xf32>, vector<8x128xf32> -> vector<8x512xf32>
    %c0_1 = arith.constant 0 : index
    %c0_2 = arith.constant 0 : index
    %2 = vector.load %arg1[%c0_1, %c0_2] : memref<8x512xf32, #tpu.memory_space<vmem>>, vector<8x512xf32>
    %3 = arith.addf %2, %1 : vector<8x512xf32>
    %c0_3 = arith.constant 0 : index
    %c0_4 = arith.constant 0 : index
    %4 = vector.load %arg3[%c0_3, %c0_4] : memref<8x512xf32, #tpu.memory_space<vmem>>, vector<8x512xf32>
    tpu.vector_store %arg3[%c0_3, %c0_4], %3 {strides = array<i32>} : memref<8x512xf32, #tpu.memory_space<vmem>>, vector<8x512xf32>,
    return
  }
  func.func @transform_0(%arg0: i32) -> (i32, i32) {
    %c0_i32 = arith.constant 0 : i32
    %c0_i32_0 = arith.constant 0 : i32
    return %arg0, %c0_i32 : i32, i32
  }
  func.func @transform_1(%arg0: i32) -> (i32, i32) {
    %c0_i32 = arith.constant 0 : i32
    %c0_i32_0 = arith.constant 0 : i32
    return %arg0, %c0_i32 : i32, i32
  }
  func.func @transform_2(%arg0: i32) -> (i32, i32) {
    %c0_i32 = arith.constant 0 : i32
    %c0_i32_0 = arith.constant 0 : i32
    return %arg0, %c0_i32 : i32, i32
  }
}

</mosaic_0001>

<llo_original>
// kernel: tpu_custom_call.1
$region0: #{tpu_custom_call.1}
  #allocation0 [shape = 'u32[]', space=smem, size = 0x4, offset = 0x4, fixed_abs, tag = 'smem constant byte address 0x4 - core index']
  #allocation1 [shape = 'u32[72,128]{1,0:T(1,128)}', space=vmem, size = 0x9000, scoped, tag = 'internal scratch']
  %s0 = inlined_call_operand.hbm [shape: f32[8,512], index: 0, kind: input, shape index: {}]
  %s1 = inlined_call_operand.hbm [shape: f32[8,128], index: 1, kind: input, shape index: {}]
  %s2 = inlined_call_operand.hbm [shape: f32[8,512], index: 2, kind: output, shape index: {}]
  %s3 = sld [smem:[#allocation0]]
  $region26: #{tpu_custom_call.1} parent=0
    _
  %s5 = ssub.s32 1, %s3
  %s6 = scalar_select 0, %s5, %s3
  $region1: #{tpu_custom_call.1} parent=0
    #allocation2 [shape = 'u8[16384]{0}', space=vmem, size = 0x4000, scoped, tag = 'input window, operand 0, single buffered']
    #allocation3 [shape = 's32[1]{0}', space=sflag, size = 0x4, scoped, tag = 'scoped memory for tpu_custom_call.1']
    #allocation4 [shape = 's32[1]{0}', space=sflag, size = 0x4, scoped, tag = 'scoped memory for tpu_custom_call.1']
    #allocation5 [shape = 'u8[4096]{0}', space=vmem, size = 0x1000, scoped, tag = 'input window, operand 1, single buffered']
    #allocation6 [shape = 's32[1]{0}', space=sflag, size = 0x4, scoped, tag = 'scoped memory for tpu_custom_call.1']
    #allocation7 [shape = 'u8[16384]{0}', space=vmem, size = 0x4000, scoped, tag = 'output window, operand 0, single buffered']
    %7 = vsyncpa [#allocation3], 0
    %8 = vsyncpa [#allocation6], 0
    %9 = vsyncpa [#allocation4], 0
    // Predicated region
    $region2: #{tpu_custom_call.1} parent=1 // pred_check
      _
    $region3: #{tpu_custom_call.1} parent=1 // pred_check_branch
      %11 = sbr.rel (0) target = $region5
    $region4: #{tpu_custom_call.1} parent=1 // pred_region
      %13 = vsyncadd [#allocation3], 0
      %s15 = sshll.u32 %s0, 4
      %s16 = int_to_ptr.hbm [resolvable:$true] %s15
      %s17 = sshll.u32 [#allocation2], 4
      %s18 = int_to_ptr.vmem [resolvable:$true] %s17
      %20 = dma.hbm_to_vmem [thread:$0]  %s16, 512, %s18, [#allocation3]
    $region5: #{tpu_custom_call.1} parent=1 // pred_fallthru
      _
    // Predicated region
    $region6: #{tpu_custom_call.1} parent=1 // pred_check
      _
    $region7: #{tpu_custom_call.1} parent=1 // pred_check_branch
      %22 = sbr.rel (0) target = $region9
    $region8: #{tpu_custom_call.1} parent=1 // pred_region
      %24 = vsyncadd [#allocation6], 0
      %s26 = sshll.u32 %s1, 4
      %s27 = int_to_ptr.hbm [resolvable:$true] %s26
      %s28 = sshll.u32 [#allocation5], 4
      %s29 = int_to_ptr.vmem [resolvable:$true] %s28
      %31 = dma.hbm_to_vmem [thread:$0]  %s27, 128, %s29, [#allocation6]
    $region9: #{tpu_custom_call.1} parent=1 // pred_fallthru
      _
    // Predicated region
    $region10: #{tpu_custom_call.1} parent=1 // pred_check
      _
    $region11: #{tpu_custom_call.1} parent=1 // pred_check_branch
      %33 = sbr.rel (0) target = $region13
    $region12: #{tpu_custom_call.1} parent=1 // pred_region
      %35 = dma.done [#allocation3], 512
    $region13: #{tpu_custom_call.1} parent=1 // pred_fallthru
      _
    // Predicated region
    $region14: #{tpu_custom_call.1} parent=1 // pred_check
      _
    $region15: #{tpu_custom_call.1} parent=1 // pred_check_branch
      %37 = sbr.rel (0) target = $region17
    $region16: #{tpu_custom_call.1} parent=1 // pred_region
      %39 = dma.done [#allocation6], 128
    $region17: #{tpu_custom_call.1} parent=1 // pred_fallthru
      _
    %v40 = vld [vmem:[#allocation5] sm:$0xff]
    %v41 = vld [vmem:[#allocation2] sm:$0xff]
    %v42 = vld [vmem:[#allocation2 + $0x8] sm:$0xff]
    %v43 = vld [vmem:[#allocation2 + $0x10] sm:$0xff]
    %v44 = vld [vmem:[#allocation2 + $0x18] sm:$0xff]
    %v45 = vadd.f32 %v41, %v40
    %v46 = vadd.f32 %v42, %v40
    %v47 = vadd.f32 %v43, %v40
    %v48 = vadd.f32 %v44, %v40
    %49 = vst [vmem:[#allocation7] sm:$0xff] %v45
    %50 = vst [vmem:[#allocation7 + $0x8] sm:$0xff] %v46
    %51 = vst [vmem:[#allocation7 + $0x10] sm:$0xff] %v47
    %52 = vst [vmem:[#allocation7 + $0x18] sm:$0xff] %v48
    // Predicated region
    $region18: #{tpu_custom_call.1} parent=1 // pred_check
      _
    $region19: #{tpu_custom_call.1} parent=1 // pred_check_branch
      %54 = sbr.rel (0) target = $region21
    $region20: #{tpu_custom_call.1} parent=1 // pred_region
      %56 = vsyncadd [#allocation4], 0
      %s58 = sshll.u32 [#allocation7], 4
      %s59 = int_to_ptr.vmem [resolvable:$true] %s58
      %s60 = sshll.u32 %s2, 4
      %s61 = int_to_ptr.hbm [resolvable:$true] %s60
      %63 = dma.vmem_to_hbm [thread:$0]  %s59, 512, %s61, [#allocation4]
    $region21: #{tpu_custom_call.1} parent=1 // pred_fallthru
      _
    // Predicated region
    $region22: #{tpu_custom_call.1} parent=1 // pred_check
      _
    $region23: #{tpu_custom_call.1} parent=1 // pred_check_branch
      %65 = sbr.rel (0) target = $region25
    $region24: #{tpu_custom_call.1} parent=1 // pred_region
      %67 = dma.done [#allocation4], 512
    $region25: #{tpu_custom_call.1} parent=1 // pred_fallthru
      _
    %68 = vsyncpa [#allocation3], 1
    %69 = vsyncpa [#allocation6], 1
    %70 = vsyncpa [#allocation4], 1

</llo_original>
